<compile_context>
chip_gen: v7x
topology: tpu7x:2x2x1
jax: 0.10.0
libtpu: 0.0.40
codegen_flags: <defaults>
</compile_context>

<pallas_src>
import jax
import jax.numpy as jnp
from jax.experimental import pallas as pl
from jax.experimental.pallas import tpu as pltpu

# ---- End2End hyper-parameters (defaults from the PyTorch module) ----
MAX_WH = 640.0        # class offset applied to boxes before NMS
NC = 80               # number of classes
OUT = NC + 4 + 1      # classes + xyxy box + objectness = 85
OUT_PAD = ((OUT + 7) // 8) * 8   # pad head rows to a sublane multiple (88)
OUT_ROWS = 8          # packed output rows: 4 box + 1 score + 1 cls + 2 pad
# max_obj / iou_thres / score_thres / pooler_scale belong to the NMS op itself
# (see TODO above) and do not affect the pre-NMS math.


def _cdiv(a, b):
    return (a + b - 1) // b


def _end2end_kernel(x_ref, w_ref, b_ref, out_ref):
    """One (batch, N-tile) grid step.

    x_ref   : [1, C, TN]        per-pixel features (channels on sublanes)
    w_ref   : [OUT_PAD, C]      fused head weights (cls | xyxy box | conf | pad)
    b_ref   : [OUT_PAD, 1]      fused head bias (f32)
    out_ref : [1, 8, TN] f32    rows 0..3 class-offset xyxy box, 4 best score,
                                5 class id (exact small float), 6..7 zero pad
    """
    x = x_ref[0]                                            # [C, TN]

    # --- fused 1x1-conv detection head: one MXU matmul + one bias add ---
    head = jnp.dot(w_ref[...], x,
                   preferred_element_type=jnp.float32) + b_ref[...]   # [OUT_PAD, TN]

    cls_sc = head[0:NC, :]                                  # [NC, TN] class scores
    box = head[NC:NC + 4, :]                                # [4, TN]  xyxy (cm pre-folded)
    conf = head[NC + 4:NC + 5, :]                           # [1, TN]  objectness

    # --- ONNX_ORT.forward (pre-NMS part) ---
    scores = cls_sc * conf                                  # score *= conf
    max_score = jnp.max(scores, axis=0, keepdims=True)      # [1, TN]
    # first index achieving the max (matches torch.max tie-breaking)
    iota = jax.lax.broadcasted_iota(jnp.int32, scores.shape, 0)
    obj_cls = jnp.min(jnp.where(scores == max_score, iota, NC),
                      axis=0, keepdims=True)                # [1, TN] int32
    cls_f = obj_cls.astype(jnp.float32)                     # exact for 0..80

    # dis = objCls.float() * max_wh ; nmsbox = box + dis
    nmsbox = box + cls_f * MAX_WH                           # [4, TN]

    # single sublane-aligned packed store (one output DMA per step)
    packed = jnp.concatenate(
        [nmsbox, max_score, cls_f, jnp.zeros_like(nmsbox[:2])], axis=0)  # [8, TN]
    out_ref[0] = packed


def fuse_params(params, dtype=jnp.float32):
    """Fold the xywh->xyxy convert matrix into the box head and concatenate the
    three heads into one [OUT_PAD, C] weight / [OUT_PAD, 1] bias (host-side)."""
    C = params["w_box"].shape[0]
    cm = jnp.array([[1.0, 0.0, 1.0, 0.0],
                    [0.0, 1.0, 0.0, 1.0],
                    [-0.5, 0.0, 0.5, 0.0],
                    [0.0, -0.5, 0.0, 0.5]], dtype=jnp.float32)
    w_box = params["w_box"] @ cm                            # [C, 4]
    b_box = params["b_box"] @ cm                            # [1, 4]

    w = jnp.zeros((OUT_PAD, C), jnp.float32)
    w = w.at[0:NC, :].set(params["w_cls"].T)
    w = w.at[NC:NC + 4, :].set(w_box.T)
    w = w.at[NC + 4, :].set(params["w_conf"][:, 0])

    b = jnp.zeros((OUT_PAD, 1), jnp.float32)
    b = b.at[0:NC, :].set(params["b_cls"].T)
    b = b.at[NC:NC + 4, :].set(b_box.T)
    b = b.at[NC + 4, 0].set(params["b_conf"][0, 0])
    return w.astype(dtype), b                               # bias stays f32


def _pick_tile_n(N, C, B, dsize, tile_n):
    """Lane-aligned N-tile, VMEM-capped (safe under the v5e 16 MiB scoped
    default) and with >= 2 total grid steps so both v7x TensorCores get work."""
    tn = min(int(tile_n), _cdiv(N, 128) * 128)
    tn = max(128, (tn // 128) * 128)

    budget = 12 * 1024 * 1024   # leave headroom under the 16 MiB v5e default

    def est(t):
        feat = 2 * C * t * dsize                 # double-buffered features
        outs = 2 * OUT_ROWS * t * 4              # double-buffered packed output
        wts = 2 * (OUT_PAD * C * dsize + OUT_PAD * 4)
        return feat + outs + wts

    while tn > 128 and est(tn) > budget:
        tn -= 128

    # keep at least 2 total grid steps (v7x megacore)
    while B * _cdiv(N, tn) < 2 and tn > 128:
        tn = max(128, ((tn // 2) // 128) * 128)
    return tn


def end2end_forward(x_nchw, params, *, tile_n=4096):
    """x_nchw: [B, C, H, W]. Returns (nmsbox [B,N,4], score [B,N,1], cls [B,N,1])."""
    B, C, H, W = x_nchw.shape
    N = H * W

    # NCHW is already per-pixel channel-major: a reshape gives [B, C, N]
    # without any transpose / cast / pad before the kernel.
    feats = x_nchw.reshape(B, C, N)
    dsize = jnp.dtype(feats.dtype).itemsize
    w_fused, b_fused = fuse_params(params, dtype=feats.dtype)

    tn = _pick_tile_n(N, C, B, dsize, tile_n)
    grid = (B, _cdiv(N, tn))        # ragged: boundary block is masked by Pallas

    cost = pl.CostEstimate(
        flops=int(2 * B * N * OUT_PAD * C),
        transcendentals=0,
        bytes_accessed=int(B * C * N * dsize
                           + B * OUT_ROWS * N * 4
                           + OUT_PAD * C * dsize + OUT_PAD * 4),
    )

    out = pl.pallas_call(
        _end2end_kernel,
        out_shape=jax.ShapeDtypeStruct((B, OUT_ROWS, N), jnp.float32),
        grid=grid,
        in_specs=[
            pl.BlockSpec((1, C, tn), lambda b, n: (b, 0, n)),      # features
            pl.BlockSpec((OUT_PAD, C), lambda b, n: (0, 0)),       # fused weights
            pl.BlockSpec((OUT_PAD, 1), lambda b, n: (0, 0)),       # fused bias
        ],
        out_specs=pl.BlockSpec((1, OUT_ROWS, tn), lambda b, n: (b, 0, n)),
        compiler_params=pltpu.CompilerParams(
            dimension_semantics=("parallel", "parallel")),
        cost_estimate=cost,
    )(feats, w_fused, b_fused)

    # Glue back to the module's [B, N, ...] layout (cheap layout plumbing,
    # outside the kernel; the downstream NMS op could instead consume the
    # channel-major slab directly and skip these transposes).
    nmsbox = jnp.transpose(out[:, 0:4, :], (0, 2, 1))
    score = jnp.transpose(out[:, 4:5, :], (0, 2, 1))
    cls = jnp.transpose(out[:, 5:6, :], (0, 2, 1)).astype(jnp.int32)
    return nmsbox, score, cls


def init_params(key, C):
    """Deterministic synthetic detection-head parameters."""
    ks = jax.random.split(key, 6)
    return {
        "w_box": 0.1 * jax.random.normal(ks[0], (C, 4), jnp.float32),
        "b_box": 0.1 * jax.random.normal(ks[1], (1, 4), jnp.float32),
        "w_conf": 0.1 * jax.random.normal(ks[2], (C, 1), jnp.float32),
        "b_conf": 0.1 * jax.random.normal(ks[3], (1, 1), jnp.float32),
        "w_cls": 0.1 * jax.random.normal(ks[4], (C, NC), jnp.float32),
        "b_cls": 0.1 * jax.random.normal(ks[5], (1, NC), jnp.float32),
    }


def _check(x, params, tile_n=4096):
    """Run the kernel and compare against a pure-JAX f32 reference."""
    nmsbox, score, cls = end2end_forward(x, params, tile_n=tile_n)
    jax.block_until_ready((nmsbox, score, cls))

    B, C, H, W = x.shape
    hp = jax.lax.Precision.HIGHEST
    feats = jnp.transpose(x, (0, 2, 3, 1)).reshape(B, H * W, C)
    box_ref = jnp.dot(feats, params["w_box"], precision=hp) + params["b_box"]
    conf_ref = jnp.dot(feats, params["w_conf"], precision=hp) + params["b_conf"]
    scores_ref = (jnp.dot(feats, params["w_cls"], precision=hp)
                  + params["b_cls"]) * conf_ref
    cm = jnp.array([[1, 0, 1, 0], [0, 1, 0, 1],
                    [-0.5, 0, 0.5, 0], [0, -0.5, 0, 0.5]], jnp.float32)
    box_xyxy_ref = jnp.dot(box_ref, cm, precision=hp)
    max_ref = jnp.max(scores_ref, axis=-1, keepdims=True)

    # best score matches
    assert jnp.allclose(score, max_ref, atol=1e-2), "score mismatch"
    # the chosen class attains the max score (robust to fp near-ties)
    picked = jnp.take_along_axis(scores_ref, cls, axis=-1)
    assert jnp.allclose(picked, max_ref, atol=1e-2), "cls is not an argmax"
    # class-offset xyxy boxes match (using the kernel's own class choice)
    nmsbox_ref = box_xyxy_ref + cls.astype(jnp.float32) * MAX_WH
    assert jnp.allclose(nmsbox, nmsbox_ref, atol=2e-2), "nmsbox mismatch"


if __name__ == "__main__":
    key = jax.random.PRNGKey(0)
    k_x, k_p = jax.random.split(key)

    # small NCHW image batch (N divisible by 128)
    B, C, H, W = 2, 4, 16, 16
    x = jax.random.normal(k_x, (B, C, H, W), jnp.float32)
    params = init_params(k_p, C)
    _check(x, params)

    # ragged-N path: N = 288 with tn = 128 -> boundary tile is masked by
    # Pallas; no host-side jnp.pad of the feature tensor is needed.
    B2, C2, H2, W2 = 1, 8, 18, 16
    x2 = jax.random.normal(jax.random.PRNGKey(1), (B2, C2, H2, W2), jnp.float32)
    params2 = init_params(jax.random.PRNGKey(2), C2)
    _check(x2, params2, tile_n=128)

    print("KERNEL_OK")
</pallas_src>

<mosaic_0001>
module attributes {stable_mosaic.version = 11 : i64} {
  func.func @_end2end_kernel(%arg0: i32, %arg1: i32, %arg2: memref<1x4x256xf32, #tpu.memory_space<vmem>>, %arg3: memref<88x4xf32, #tpu.memory_space<vmem>>, %arg4: memref<88x1xf32, #tpu.memory_space<vmem>>, %arg5: memref<1x8x256xf32, #tpu.memory_space<vmem>>) attributes {dimension_semantics = [#tpu.dimension_semantics<parallel>, #tpu.dimension_semantics<parallel>], iteration_bounds = array<i64: 2, 1>, scalar_prefetch = 0 : i64, scratch_operands = 0 : i64, tpu.core_type = #tpu.core_type<tc>, window_params = [{transform_indices = @transform_0, window_bounds = array<i64: 1, 4, 256>}, {pipeline_mode = #tpu.pipeline_mode<synchronous>, transform_indices = @transform_1, window_bounds = array<i64: 88, 4>}, {pipeline_mode = #tpu.pipeline_mode<synchronous>, transform_indices = @transform_2, window_bounds = array<i64: 88, 1>}, {transform_indices = @transform_3, window_bounds = array<i64: 1, 8, 256>}]} {
    %c0 = arith.constant 0 : index
    %c0_0 = arith.constant 0 : index
    %c0_1 = arith.constant 0 : index
    %0 = vector.load %arg2[%c0, %c0_0, %c0_1] : memref<1x4x256xf32, #tpu.memory_space<vmem>>, vector<1x4x256xf32>
    %1 = vector.shape_cast %0 : vector<1x4x256xf32> to vector<4x256xf32>
    %c0_2 = arith.constant 0 : index
    %c0_3 = arith.constant 0 : index
    %2 = vector.load %arg3[%c0_2, %c0_3] : memref<88x4xf32, #tpu.memory_space<vmem>>, vector<88x4xf32>
    %cst = arith.constant dense<0.000000e+00> : vector<88x256xf32>
    %3 = tpu.matmul %2, %1, %cst {dimension_numbers = #tpu.dot_dimension_numbers<[1], [0], [0], [1], [0, 0, 1, 1], [], []>} : vector<88x4xf32>, vector<4x256xf32>, vector<88x256xf32> -> vector<88x256xf32>
    %c0_4 = arith.constant 0 : index
    %c0_5 = arith.constant 0 : index
    %4 = vector.load %arg4[%c0_4, %c0_5] : memref<88x1xf32, #tpu.memory_space<vmem>>, vector<88x1xf32>
    %5 = vector.broadcast %4 : vector<88x1xf32> to vector<88x256xf32>
    %6 = arith.addf %3, %5 : vector<88x256xf32>
    %7 = vector.extract_strided_slice %6 {offsets = [0, 0], sizes = [80, 256], strides = [1, 1]} : vector<88x256xf32> to vector<80x256xf32>
    %8 = vector.extract_strided_slice %6 {offsets = [80, 0], sizes = [4, 256], strides = [1, 1]} : vector<88x256xf32> to vector<4x256xf32>
    %9 = vector.extract_strided_slice %6 {offsets = [84, 0], sizes = [1, 256], strides = [1, 1]} : vector<88x256xf32> to vector<1x256xf32>
    %10 = vector.broadcast %9 : vector<1x256xf32> to vector<80x256xf32>
    %11 = arith.mulf %7, %10 : vector<80x256xf32>
    %cst_6 = arith.constant dense<0xFF800000> : vector<256xf32>
    %12 = vector.multi_reduction <maximumf>, %11, %cst_6 [0] : vector<80x256xf32> to vector<256xf32>
    %13 = vector.shape_cast %12 : vector<256xf32> to vector<1x256xf32>
    %14 = tpu.iota {dimensions = array<i32: 0>} : vector<80x256xi32>
    %15 = vector.broadcast %13 : vector<1x256xf32> to vector<80x256xf32>
    %16 = arith.cmpf oeq, %11, %15 : vector<80x256xf32>
    %c80_i32 = arith.constant 80 : i32
    %17 = vector.broadcast %c80_i32 : i32 to vector<80x256xi32>
    %18 = arith.select %16, %14, %17 : vector<80x256xi1>, vector<80x256xi32>
    %cst_7 = arith.constant dense<2147483647> : vector<256xi32>
    %19 = vector.multi_reduction <minsi>, %18, %cst_7 [0] : vector<80x256xi32> to vector<256xi32>
    %20 = vector.shape_cast %19 : vector<256xi32> to vector<1x256xi32>
    %21 = arith.sitofp %20 : vector<1x256xi32> to vector<1x256xf32>
    %cst_8 = arith.constant 6.400000e+02 : f32
    %22 = vector.broadcast %cst_8 : f32 to vector<1x256xf32>
    %23 = arith.mulf %21, %22 : vector<1x256xf32>
    %24 = vector.broadcast %23 : vector<1x256xf32> to vector<4x256xf32>
    %25 = arith.addf %8, %24 : vector<4x256xf32>
    %cst_9 = arith.constant 0.000000e+00 : f32
    %26 = vector.broadcast %cst_9 : f32 to vector<2x256xf32>
    %27 = tpu.concatenate %25, %13, %21, %26 in 0 : vector<4x256xf32>, vector<1x256xf32>, vector<1x256xf32>, vector<2x256xf32> -> vector<8x256xf32>
    %c0_10 = arith.constant 0 : index
    %c0_11 = arith.constant 0 : index
    %c0_12 = arith.constant 0 : index
    %28 = vector.load %arg5[%c0_10, %c0_11, %c0_12] : memref<1x8x256xf32, #tpu.memory_space<vmem>>, vector<1x8x256xf32>
    %29 = vector.shape_cast %28 : vector<1x8x256xf32> to vector<8x256xf32>
    %30 = vector.shape_cast %27 : vector<8x256xf32> to vector<1x8x256xf32>
    tpu.vector_store %arg5[%c0_10, %c0_11, %c0_12], %30 {strides = array<i32>} : memref<1x8x256xf32, #tpu.memory_space<vmem>>, vector<1x8x256xf32>,
    return
  }
  func.func @transform_0(%arg0: i32, %arg1: i32) -> (i32, i32, i32) {
    %c0_i32 = arith.constant 0 : i32
    %c0_i32_0 = arith.constant 0 : i32
    return %arg0, %c0_i32, %arg1 : i32, i32, i32
  }
  func.func @transform_1(%arg0: i32, %arg1: i32) -> (i32, i32) {
    %c0_i32 = arith.constant 0 : i32
    %c0_i32_0 = arith.constant 0 : i32
    %c0_i32_1 = arith.constant 0 : i32
    return %c0_i32, %c0_i32_0 : i32, i32
  }
  func.func @transform_2(%arg0: i32, %arg1: i32) -> (i32, i32) {
    %c0_i32 = arith.constant 0 : i32
    %c0_i32_0 = arith.constant 0 : i32
    %c0_i32_1 = arith.constant 0 : i32
    return %c0_i32, %c0_i32_0 : i32, i32
  }
  func.func @transform_3(%arg0: i32, %arg1: i32) -> (i32, i32, i32) {
    %c0_i32 = arith.constant 0 : i32
    %c0_i32_0 = arith.constant 0 : i32
    return %arg0, %c0_i32, %arg1 : i32, i32, i32
  }
}

</mosaic_0001>

<llo_original>
// kernel: tpu_custom_call.1
$region0: #{tpu_custom_call.1}
  #allocation0 [shape = 'u32[]', space=smem, size = 0x4, offset = 0x4, fixed_abs, tag = 'smem constant byte address 0x4 - core index']
  #allocation1 [shape = 'u32[144,128]{1,0:T(1,128)}', space=vmem, size = 0x12000, scoped, tag = 'internal scratch']
  %s0 = inlined_call_operand.vmem [shape: f32[2,4,256], index: 0, kind: input, shape index: {}]
  %s1 = inlined_call_operand.vmem [shape: f32[88,4], index: 1, kind: input, shape index: {}]
  %s2 = inlined_call_operand.vmem [shape: f32[88,1], index: 2, kind: input, shape index: {}]
  %s3 = inlined_call_operand.hbm [shape: f32[2,8,256], index: 3, kind: output, shape index: {}]
  %s4 = sld [smem:[#allocation0]]
  $region45: #{tpu_custom_call.1} parent=0
    _
  %s6 = ssub.s32 1, %s4
  %s7 = scalar_select 0, %s6, %s4
  $region1: #{tpu_custom_call.1} parent=0
    #allocation2 [shape = 'u8[16384]{0}', space=vmem, size = 0x4000, scoped, tag = 'output window, operand 0']
    #allocation3 [shape = 's32[2]{0}', space=sflag, size = 0x8, scoped, tag = 'scoped memory for tpu_custom_call.1']
    %8 = vsyncpa [#allocation3], 0
    %s9 = scalar_lea.sflag [#allocation3], 1
    %10 = vsyncpa %s9, 0
    loop: start=0, step=1, limit=4
    $region2: #{tpu_custom_call.1} parent=1 // loop_pre_header
      _
    $region3: #{tpu_custom_call.1} parent=1 // loop_header
      %s12 = sphi 0, %s16
      %p13 = scmp.ge.s32.totalorder %s12, 4
      %s19 = sphi 0, %s31
      %s20 = sphi 0, %s27
      %s21 = sphi 0, %s19
      %s22 = sphi 0, %s20
      %s23 = sphi 0, %s21
      %s24 = sphi 0, %s22
      %s36 = sphi 0, %s38
      %s39 = sphi 0, %s36
      %s40 = sphi 0, %s39
      %s56 = sphi 0, %s40
      %s60 = sphi 0, %s60
      %s62 = sphi 0, %s60
      %s63 = sphi 0, %s62
      %s77 = sphi 0, %s63
      %s81 = sphi 0, %s81
      %s83 = sphi 0, %s81
      %s84 = sphi 0, %s83
      %s98 = sphi 0, %s84
      %s106 = sphi 0, %s108
      %s109 = sphi 0, %s106
      %s110 = sphi 0, %s109
      %s126 = sphi 0, %s110
    $region4: #{tpu_custom_call.1} parent=1 // loop_header_branch
      %15 = sbr.rel (%p13) target = $region8
    $region5: #{tpu_custom_call.1} parent=1 // loop_body
      %s17 = ssub.s32 %s12, 1
      %s18 = ssub.s32 %s12, 2
      %s25 = sadd.s32 1, %s20
      %p26 = scmp.ge.s32.totalorder %s25, 1
      %s27 = scalar_select %p26, 0, %s25
      %s28 = sadd.s32 1, %s19
      %s29 = scalar_select %p26, %s28, %s19
      %p30 = scmp.ge.s32.totalorder %s29, 2
      %s31 = scalar_select %p30, 0, %s29
      %s32 = ssub.s32 %s19, %s31
      %s33 = ssub.s32 %s20, %s27
      %s34 = sor.u32 %s32, %s33
      %p35 = scmp.eq.s32.totalorder %s34, 0
      %s37 = sadd.s32 %s36, 1
      %s38 = scalar_select %p35, %s36, %s37
      %p41 = pneg %p35
      %p42 = scmp.eq.s32.totalorder %s12, 1
      %p43 = por %p41, %p42
      %p44 = scmp.ne.s32.totalorder %s36, %s39
      %p45 = scmp.eq.s32.totalorder %s12, 0
      %p46 = por %p44, %p45
      %p47 = scmp.ne.s32.totalorder %s36, %s39
      %p48 = scmp.eq.s32.totalorder %s17, 1
      %p49 = por %p47, %p48
      %p50 = scmp.ne.s32.totalorder %s39, %s40
      %p51 = scmp.eq.s32.totalorder %s17, 0
      %p52 = por %p50, %p51
      %p53 = scmp.ne.s32.totalorder %s39, %s40
      %p54 = scmp.eq.s32.totalorder %s18, 1
      %p55 = por %p53, %p54
      %p57 = scmp.ne.s32.totalorder %s40, %s56
      %p58 = scmp.eq.s32.totalorder %s18, 0
      %p59 = por %p57, %p58
      %s61 = sadd.s32 %s60, 1
      %p64 = scmp.eq.s32.totalorder %s12, 1
      %p65 = scmp.ne.s32.totalorder %s60, %s62
      %p66 = scmp.eq.s32.totalorder %s12, 0
      %p67 = por %p65, %p66
      %p68 = scmp.ne.s32.totalorder %s60, %s62
      %p69 = scmp.eq.s32.totalorder %s17, 1
      %p70 = por %p68, %p69
      %p71 = scmp.ne.s32.totalorder %s62, %s63
      %p72 = scmp.eq.s32.totalorder %s17, 0
      %p73 = por %p71, %p72
      %p74 = scmp.ne.s32.totalorder %s62, %s63
      %p75 = scmp.eq.s32.totalorder %s18, 1
      %p76 = por %p74, %p75
      %p78 = scmp.ne.s32.totalorder %s63, %s77
      %p79 = scmp.eq.s32.totalorder %s18, 0
      %p80 = por %p78, %p79
      %s82 = sadd.s32 %s81, 1
      %p85 = scmp.eq.s32.totalorder %s12, 1
      %p86 = scmp.ne.s32.totalorder %s81, %s83
      %p87 = scmp.eq.s32.totalorder %s12, 0
      %p88 = por %p86, %p87
      %p89 = scmp.ne.s32.totalorder %s81, %s83
      %p90 = scmp.eq.s32.totalorder %s17, 1
      %p91 = por %p89, %p90
      %p92 = scmp.ne.s32.totalorder %s83, %s84
      %p93 = scmp.eq.s32.totalorder %s17, 0
      %p94 = por %p92, %p93
      %p95 = scmp.ne.s32.totalorder %s83, %s84
      %p96 = scmp.eq.s32.totalorder %s18, 1
      %p97 = por %p95, %p96
      %p99 = scmp.ne.s32.totalorder %s84, %s98
      %p100 = scmp.eq.s32.totalorder %s18, 0
      %p101 = por %p99, %p100
      %s102 = ssub.s32 %s19, %s31
      %s103 = ssub.s32 %s20, %s27
      %s104 = sor.u32 %s102, %s103
      %p105 = scmp.eq.s32.totalorder %s104, 0
      %s107 = sadd.s32 %s106, 1
      %s108 = scalar_select %p105, %s106, %s107
      %p111 = pneg %p105
      %p112 = scmp.eq.s32.totalorder %s12, 1
      %p113 = por %p111, %p112
      %p114 = scmp.ne.s32.totalorder %s106, %s109
      %p115 = scmp.eq.s32.totalorder %s12, 0
      %p116 = por %p114, %p115
      %p117 = scmp.ne.s32.totalorder %s106, %s109
      %p118 = scmp.eq.s32.totalorder %s17, 1
      %p119 = por %p117, %p118
      %p120 = scmp.ne.s32.totalorder %s109, %s110
      %p121 = scmp.eq.s32.totalorder %s17, 0
      %p122 = por %p120, %p121
      %p123 = scmp.ne.s32.totalorder %s109, %s110
      %p124 = scmp.eq.s32.totalorder %s18, 1
      %p125 = por %p123, %p124
      %p127 = scmp.ne.s32.totalorder %s110, %s126
      %p128 = scmp.eq.s32.totalorder %s18, 0
      %p129 = por %p127, %p128
      %p130 = scmp.le.s32.totalorder 1, %s12
      %p131 = scmp.lt.s32.totalorder %s12, 3
      %p132 = pnand %p130, %p131
      %p133 = pneg %p132
      // Predicated region
      $region9: #{tpu_custom_call.1} parent=5 // pred_check
        _
      $region10: #{tpu_custom_call.1} parent=5 // pred_check_branch
        %135 = sbr.rel (%p132) target = $region12
      $region11: #{tpu_custom_call.1} parent=5 // pred_region
        %s136 = ssub.s32 %s12, 1
        // Predicated region
        $region13: #{tpu_custom_call.1} parent=11 // pred_check
          %p137 = pneg %p73
        $region14: #{tpu_custom_call.1} parent=11 // pred_check_branch
          %139 = sbr.rel (%p137) target = $region16
        $region15: #{tpu_custom_call.1} parent=11 // pred_region
          _
        $region16: #{tpu_custom_call.1} parent=11 // pred_fallthru
          _
        // Predicated region
        $region17: #{tpu_custom_call.1} parent=11 // pred_check
          %p140 = pneg %p94
        $region18: #{tpu_custom_call.1} parent=11 // pred_check_branch
          %142 = sbr.rel (%p140) target = $region20
        $region19: #{tpu_custom_call.1} parent=11 // pred_region
          _
        $region20: #{tpu_custom_call.1} parent=11 // pred_fallthru
          _
      $region12: #{tpu_custom_call.1} parent=5 // pred_fallthru
        _
      %p143 = scmp.lt.s32.totalorder %s12, 2
      // Predicated region
      $region21: #{tpu_custom_call.1} parent=5 // pred_check
        %p144 = pneg %p143
      $region22: #{tpu_custom_call.1} parent=5 // pred_check_branch
        %146 = sbr.rel (%p144) target = $region24
      $region23: #{tpu_custom_call.1} parent=5 // pred_region
        // Predicated region
        $region25: #{tpu_custom_call.1} parent=23 // pred_check
          %p147 = pneg %p46
        $region26: #{tpu_custom_call.1} parent=23 // pred_check_branch
          %149 = sbr.rel (%p147) target = $region28
        $region27: #{tpu_custom_call.1} parent=23 // pred_region
          %s150 = smul.u32 2, %s20
          %p151 = scmp.lt.s32.totalorder %s19, 1
          %s152 = scalar_select %p151, %s19, 1
          %p153 = scmp.lt.s32.totalorder %s150, 1
          %s154 = scalar_select %p153, %s150, 1
          %s155 = smul.addr %s152, 2
          %s156 = sadd.s32 %s154, %s155
          %s157 = smul.addr %s156, 4
          %s158 = scalar_lea.vmem %s0, %s157
          %s159 = smul.u32 2, %s20
        $region28: #{tpu_custom_call.1} parent=23 // pred_fallthru
          _
      $region24: #{tpu_custom_call.1} parent=5 // pred_fallthru
        _
      %p160 = scmp.le.s32.totalorder 1, %s12
      %p161 = scmp.lt.s32.totalorder %s12, 3
      %p162 = pnand %p160, %p161
      %p163 = pneg %p162
      // Predicated region
      $region29: #{tpu_custom_call.1} parent=5 // pred_check
        _
      $region30: #{tpu_custom_call.1} parent=5 // pred_check_branch
        %165 = sbr.rel (%p162) target = $region32
      $region31: #{tpu_custom_call.1} parent=5 // pred_region
        %s166 = ssub.s32 %s12, 1
        %s167 = smul.u32 2, %s22
        %p168 = scmp.lt.s32.totalorder %s21, 1
        %s169 = scalar_select %p168, %s21, 1
        %p170 = scmp.lt.s32.totalorder %s167, 1
        %s171 = scalar_select %p170, %s167, 1
        %s172 = smul.addr %s169, 2
        %s173 = sadd.s32 %s171, %s172
        %s174 = smul.addr %s173, 4
        %s175 = scalar_lea.vmem %s0, %s174
        %p176 = pneg %p52
        %p177 = pneg %p49
        %p178 = pneg %p73
        %p179 = pneg %p70
        %p180 = pneg %p94
        %p181 = pneg %p91
        %p182 = pneg %p122
        %p183 = pneg %p119
        %s184 = sand.u32 %s109, 1
        %s185 = scalar_lea.sflag [#allocation3], %s184
        %s186 = sand.u32 %s109, 1
        %s187 = smul.addr %s186, 16
        %s188 = scalar_lea.vmem [#allocation2], %s187
        %s189 = smul.u32 2, %s22
        %p190 = scmp.lt.s32.totalorder %s21, 1
        %s191 = scalar_select %p190, %s21, 1
        %p192 = scmp.lt.s32.totalorder %s189, 1
        %s193 = scalar_select %p192, %s189, 1
        %s194 = smul.addr %s191, 2
        %s195 = sadd.s32 %s193, %s194
        %s196 = smul.addr %s195, 4
        %s197 = scalar_lea.vmem %s0, %s196
        %s198 = smul.u32 2, %s22
        %s199 = smul.u32 2, %s22
        %v200 = vld [vmem:[%s197] sm:$0xff]
        %v201 = vld [vmem:[%s1] sm:$0xff]
        %v202 = vld [vmem:[%s1 + $0x8] sm:$0xff]
        %v203 = vld [vmem:[%s1 + $0x10] sm:$0xff]
        %v204 = vld [vmem:[%s1 + $0x18] sm:$0xff]
        %v205 = vld [vmem:[%s1 + $0x20] sm:$0xff]
        %v206 = vld [vmem:[%s1 + $0x28] sm:$0xff]
        %v207 = vld [vmem:[%s1 + $0x30] sm:$0xff]
        %v208 = vld [vmem:[%s1 + $0x38] sm:$0xff]
        %v209 = vld [vmem:[%s1 + $0x40] sm:$0xff]
        %v210 = vld [vmem:[%s1 + $0x48] sm:$0xff]
        %v211 = vld [vmem:[%s1 + $0x50] sm:$0xff]
        %v212 = vld [vmem:[%s2] sm:$0xff]
        %v213 = vld [vmem:[%s2 + $0x8] sm:$0xff]
        %v214 = vld [vmem:[%s2 + $0x10] sm:$0xff]
        %v215 = vld [vmem:[%s2 + $0x18] sm:$0xff]
        %v216 = vld [vmem:[%s2 + $0x20] sm:$0xff]
        %v217 = vld [vmem:[%s2 + $0x28] sm:$0xff]
        %v218 = vld [vmem:[%s2 + $0x30] sm:$0xff]
        %v219 = vld [vmem:[%s2 + $0x38] sm:$0xff]
        %v220 = vld [vmem:[%s2 + $0x40] sm:$0xff]
        %v221 = vld [vmem:[%s2 + $0x48] sm:$0xff]
        %v222 = vld [vmem:[%s2 + $0x50] sm:$0xff]
        %224 = vset.pattern.permute.xlu0 0
        %225 = vperm.xlu0 %224, %v212
        %v226 = vpop.permute.xlu0 %225
        %229 = vset.pattern.permute.xlu0 0
        %230 = vperm.xlu0 %229, %v213
        %v231 = vpop.permute.xlu0 %230
        %234 = vset.pattern.permute.xlu0 0
        %235 = vperm.xlu0 %234, %v214
        %v236 = vpop.permute.xlu0 %235
        %239 = vset.pattern.permute.xlu0 0
        %240 = vperm.xlu0 %239, %v215
        %v241 = vpop.permute.xlu0 %240
        %244 = vset.pattern.permute.xlu0 0
        %245 = vperm.xlu0 %244, %v216
        %v246 = vpop.permute.xlu0 %245
        %249 = vset.pattern.permute.xlu0 0
        %250 = vperm.xlu0 %249, %v217
        %v251 = vpop.permute.xlu0 %250
        %254 = vset.pattern.permute.xlu0 0
        %255 = vperm.xlu0 %254, %v218
        %v256 = vpop.permute.xlu0 %255
        %259 = vset.pattern.permute.xlu0 0
        %260 = vperm.xlu0 %259, %v219
        %v261 = vpop.permute.xlu0 %260
        %264 = vset.pattern.permute.xlu0 0
        %265 = vperm.xlu0 %264, %v220
        %v266 = vpop.permute.xlu0 %265
        %269 = vset.pattern.permute.xlu0 0
        %270 = vperm.xlu0 %269, %v221
        %v271 = vpop.permute.xlu0 %270
        %274 = vset.pattern.permute.xlu0 0
        %275 = vperm.xlu0 %274, %v222
        %v276 = vpop.permute.xlu0 %275
        %v279 = vcombine.high %v200, %v200
        %vm280 = vcmask 31744
        %v282 = vsel %vm280, %v201, 0
        %v285 = vsel %vm280, %v202, 0
        %v288 = vsel %vm280, %v203, 0
        %v291 = vsel %vm280, %v204, 0
        %v294 = vsel %vm280, %v205, 0
        %v297 = vsel %vm280, %v206, 0
        %v300 = vsel %vm280, %v207, 0
        %v303 = vsel %vm280, %v208, 0
        %v306 = vsel %vm280, %v209, 0
        %v309 = vsel %vm280, %v210, 0
        %v312 = vsel %vm280, %v211, 0
        %vm314 = vcmask 1043456
        %v315 = vsel %vm314, %v200, 0
        %v317 = vsel %vm314, %v279, 0
        %319 = vmatprep.subr.mxu0 %v317
        %320 = vmatpush1.msra.mxu0 %v315
        %321 = vmatprep.subr.mxu0 0.0
        %322 = vmatpush1.msra.mxu0 0.0
        %323 = vmatprep.subr.mxu0 0.0
        %324 = vmatpush1.msra.mxu0 0.0
        %325 = vmatprep.subr.mxu0 0.0
        %326 = vmatpush1.msra.mxu0 0.0
        %327 = vmatprep.subr.mxu0 0.0
        %328 = vmatpush1.msra.mxu0 0.0
        %329 = vmatprep.subr.mxu0 0.0
        %330 = vmatpush1.msra.mxu0 0.0
        %331 = vmatprep.subr.mxu0 0.0
        %332 = vmatpush1.msra.mxu0 0.0
        %333 = vmatprep.subr.mxu0 0.0
        %334 = vmatpush1.msra.mxu0 0.0
        %335 = vmatprep.subr.mxu0 0.0
        %336 = vmatpush1.msra.mxu0 0.0
        %337 = vmatprep.subr.mxu0 0.0
        %338 = vmatpush1.msra.mxu0 0.0
        %339 = vmatprep.subr.mxu0 0.0
        %340 = vmatpush1.msra.mxu0 0.0
        %341 = vmatprep.subr.mxu0 0.0
        %342 = vmatpush1.msra.mxu0 0.0
        %343 = vmatprep.subr.mxu0 0.0
        %344 = vmatpush1.msra.mxu0 0.0
        %345 = vmatprep.subr.mxu0 0.0
        %346 = vmatpush1.msra.mxu0 0.0
        %347 = vmatprep.subr.mxu0 0.0
        %348 = vmatpush1.msra.mxu0 0.0
        %349 = vmatprep.subr.mxu0 0.0
        %350 = vmatpush1.msra.mxu0 0.0
        %351 = vmatprep.subr.mxu0 0.0
        %352 = vmatpush1.msra.mxu0 0.0
        %353 = vmatprep.subr.mxu0 0.0
        %354 = vmatpush1.msra.mxu0 0.0
        %355 = vmatprep.subr.mxu0 0.0
        %356 = vmatpush1.msra.mxu0 0.0
        %357 = vmatprep.subr.mxu0 0.0
        %358 = vmatpush1.msra.mxu0 0.0
        %359 = vmatprep.subr.mxu0 0.0
        %360 = vmatpush1.msra.mxu0 0.0
        %361 = vmatprep.subr.mxu0 0.0
        %362 = vmatpush1.msra.mxu0 0.0
        %363 = vmatprep.subr.mxu0 0.0
        %364 = vmatpush1.msra.mxu0 0.0
        %365 = vmatprep.subr.mxu0 0.0
        %366 = vmatpush1.msra.mxu0 0.0
        %367 = vmatprep.subr.mxu0 0.0
        %368 = vmatpush1.msra.mxu0 0.0
        %369 = vmatprep.subr.mxu0 0.0
        %370 = vmatpush1.msra.mxu0 0.0
        %371 = vmatprep.subr.mxu0 0.0
        %372 = vmatpush1.msra.mxu0 0.0
        %373 = vmatprep.subr.mxu0 0.0
        %374 = vmatpush1.msra.mxu0 0.0
        %375 = vmatprep.subr.mxu0 0.0
        %376 = vmatpush1.msra.mxu0 0.0
        %377 = vmatprep.subr.mxu0 0.0
        %378 = vmatpush1.msra.mxu0 0.0
        %379 = vmatprep.subr.mxu0 0.0
        %380 = vmatpush1.msra.mxu0 0.0
        %381 = vmatprep.subr.mxu0 0.0
        %382 = vmatpush1.msra.mxu0 0.0
        %383 = vmatprep.mubr.f32.mxu0 0.0
        %384 = vmatmul.mubr.f32.gmra.mrb[0].mxu0 %v282
        %v385 = vpop.f32.mrb[0].mxu0
        %v386 = vadd.f32 %v226, %v385
        %v387 = vpop.f32.mrb[0].mxu0
        %v388 = vadd.f32 %v226, %v387
        %389 = vmatprep.mubr.f32.mxu0 0.0
        %390 = vmatmul.mubr.f32.gmra.mrb[0].mxu0 %v285
        %v391 = vpop.f32.mrb[0].mxu0
        %v392 = vadd.f32 %v231, %v391
        %v393 = vpop.f32.mrb[0].mxu0
        %v394 = vadd.f32 %v231, %v393
        %395 = vmatprep.mubr.f32.mxu0 0.0
        %396 = vmatmul.mubr.f32.gmra.mrb[0].mxu0 %v288
        %v397 = vpop.f32.mrb[0].mxu0
        %v398 = vadd.f32 %v236, %v397
        %v399 = vpop.f32.mrb[0].mxu0
        %v400 = vadd.f32 %v236, %v399
        %401 = vmatprep.mubr.f32.mxu0 0.0
        %402 = vmatmul.mubr.f32.gmra.mrb[0].mxu0 %v291
        %v403 = vpop.f32.mrb[0].mxu0
        %v404 = vadd.f32 %v241, %v403
        %v405 = vpop.f32.mrb[0].mxu0
        %v406 = vadd.f32 %v241, %v405
        %407 = vmatprep.mubr.f32.mxu0 0.0
        %408 = vmatmul.mubr.f32.gmra.mrb[0].mxu0 %v294
        %v409 = vpop.f32.mrb[0].mxu0
        %v410 = vadd.f32 %v246, %v409
        %v411 = vpop.f32.mrb[0].mxu0
        %v412 = vadd.f32 %v246, %v411
        %413 = vmatprep.mubr.f32.mxu0 0.0
        %414 = vmatmul.mubr.f32.gmra.mrb[0].mxu0 %v297
        %v415 = vpop.f32.mrb[0].mxu0
        %v416 = vadd.f32 %v251, %v415
        %v417 = vpop.f32.mrb[0].mxu0
        %v418 = vadd.f32 %v251, %v417
        %419 = vmatprep.mubr.f32.mxu0 0.0
        %420 = vmatmul.mubr.f32.gmra.mrb[0].mxu0 %v300
        %v421 = vpop.f32.mrb[0].mxu0
        %v422 = vadd.f32 %v256, %v421
        %v423 = vpop.f32.mrb[0].mxu0
        %v424 = vadd.f32 %v256, %v423
        %425 = vmatprep.mubr.f32.mxu0 0.0
        %426 = vmatmul.mubr.f32.gmra.mrb[0].mxu0 %v303
        %v427 = vpop.f32.mrb[0].mxu0
        %v428 = vadd.f32 %v261, %v427
        %v429 = vpop.f32.mrb[0].mxu0
        %v430 = vadd.f32 %v261, %v429
        %431 = vmatprep.mubr.f32.mxu0 0.0
        %432 = vmatmul.mubr.f32.gmra.mrb[0].mxu0 %v306
        %v433 = vpop.f32.mrb[0].mxu0
        %v434 = vadd.f32 %v266, %v433
        %v435 = vpop.f32.mrb[0].mxu0
        %v436 = vadd.f32 %v266, %v435
        %437 = vmatprep.mubr.f32.mxu0 0.0
        %438 = vmatmul.mubr.f32.gmra.mrb[0].mxu0 %v309
        %v439 = vpop.f32.mrb[0].mxu0
        %v440 = vadd.f32 %v271, %v439
        %v441 = vpop.f32.mrb[0].mxu0
        %v442 = vadd.f32 %v271, %v441
        %443 = vmatprep.mubr.f32.mxu0 0.0
        %444 = vmatmul.mubr.f32.gmra.mrb[0].mxu0 %v312
        %v445 = vpop.f32.mrb[0].mxu0
        %v446 = vadd.f32 %v276, %v445
        %v447 = vpop.f32.mrb[0].mxu0
        %v448 = vadd.f32 %v276, %v447
        %449 = vdwg.mxu0
        %v450 = vlaneseq
        %v451 = vshrl.u32 %v450, 7
        %v452 = vsub.s32 4, %v451
        %v453 = vrot.slane %v446, %v452
        %v454 = vlaneseq
        %v455 = vshrl.u32 %v454, 7
        %v456 = vsub.s32 4, %v455
        %v457 = vrot.slane %v448, %v456
        %v458 = vmul.f32 %v386, %v453
        %v459 = vmul.f32 %v388, %v457
        %v460 = vmul.f32 %v392, %v453
        %v461 = vmul.f32 %v394, %v457
        %v462 = vmul.f32 %v398, %v453
        %v463 = vmul.f32 %v400, %v457
        %v464 = vmul.f32 %v404, %v453
        %v465 = vmul.f32 %v406, %v457
        %v466 = vmul.f32 %v410, %v453
        %v467 = vmul.f32 %v412, %v457
        %v468 = vmul.f32 %v416, %v453
        %v469 = vmul.f32 %v418, %v457
        %v470 = vmul.f32 %v422, %v453
        %v471 = vmul.f32 %v424, %v457
        %v472 = vmul.f32 %v428, %v453
        %v473 = vmul.f32 %v430, %v457
        %v474 = vmul.f32 %v434, %v453
        %v475 = vmul.f32 %v436, %v457
        %v476 = vmul.f32 %v440, %v453
        %v477 = vmul.f32 %v442, %v457
        %v478 = vmax.f32 %v458, %v462
        %v479 = vmax.f32 %v460, %v464
        %v480 = vmax.f32 %v478, %v466
        %v481 = vmax.f32 %v479, %v468
        %v482 = vmax.f32 %v480, %v470
        %v483 = vmax.f32 %v481, %v472
        %v484 = vmax.f32 %v482, %v474
        %v485 = vmax.f32 %v483, %v476
        %v486 = vmax.f32 %v484, %v485
        %v487 = vrot.slane %v486, 4
        %v488 = vmax.f32 %v486, %v487
        %v489 = vrot.slane %v488, 2
        %v490 = vmax.f32 %v488, %v489
        %v491 = vrot.slane %v490, 1
        %v492 = vmax.f32 %v490, %v491
        %v493 = vmax.f32 %v459, %v463
        %v494 = vmax.f32 %v461, %v465
        %v495 = vmax.f32 %v493, %v467
        %v496 = vmax.f32 %v494, %v469
        %v497 = vmax.f32 %v495, %v471
        %v498 = vmax.f32 %v496, %v473
        %v499 = vmax.f32 %v497, %v475
        %v500 = vmax.f32 %v498, %v477
        %v501 = vmax.f32 %v499, %v500
        %v502 = vrot.slane %v501, 4
        %v503 = vmax.f32 %v501, %v502
        %v504 = vrot.slane %v503, 2
        %v505 = vmax.f32 %v503, %v504
        %v506 = vrot.slane %v505, 1
        %v507 = vmax.f32 %v505, %v506
        %v508 = vlaneseq
        %v509 = vshrl.u32 %v508, 7
        %v510 = vadd.s32 %v509, 8
        %v511 = vadd.s32 %v509, 16
        %v512 = vadd.s32 %v509, 24
        %v513 = vadd.s32 %v509, 32
        %v514 = vadd.s32 %v509, 40
        %v515 = vadd.s32 %v509, 48
        %v516 = vadd.s32 %v509, 56
        %v517 = vadd.s32 %v509, 64
        %v518 = vadd.s32 %v509, 72
        %vm519 = vcmp.eq.f32.partialorder %v458, %v492
        %vm520 = vcmp.eq.f32.partialorder %v459, %v507
        %vm521 = vcmp.eq.f32.partialorder %v460, %v492
        %vm522 = vcmp.eq.f32.partialorder %v461, %v507
        %vm523 = vcmp.eq.f32.partialorder %v462, %v492
        %vm524 = vcmp.eq.f32.partialorder %v463, %v507
        %vm525 = vcmp.eq.f32.partialorder %v464, %v492
        %vm526 = vcmp.eq.f32.partialorder %v465, %v507
        %vm527 = vcmp.eq.f32.partialorder %v466, %v492
        %vm528 = vcmp.eq.f32.partialorder %v467, %v507
        %vm529 = vcmp.eq.f32.partialorder %v468, %v492
        %vm530 = vcmp.eq.f32.partialorder %v469, %v507
        %vm531 = vcmp.eq.f32.partialorder %v470, %v492
        %vm532 = vcmp.eq.f32.partialorder %v471, %v507
        %vm533 = vcmp.eq.f32.partialorder %v472, %v492
        %vm534 = vcmp.eq.f32.partialorder %v473, %v507
        %vm535 = vcmp.eq.f32.partialorder %v474, %v492
        %vm536 = vcmp.eq.f32.partialorder %v475, %v507
        %vm537 = vcmp.eq.f32.partialorder %v476, %v492
        %vm538 = vcmp.eq.f32.partialorder %v477, %v507
        %v539 = vsel %vm519, %v509, 80
        %v540 = vsel %vm520, %v509, 80
        %v541 = vsel %vm521, %v510, 80
        %v542 = vsel %vm522, %v510, 80
        %v543 = vsel %vm523, %v511, 80
        %v544 = vsel %vm524, %v511, 80
        %v545 = vsel %vm525, %v512, 80
        %v546 = vsel %vm526, %v512, 80
        %v547 = vsel %vm527, %v513, 80
        %v548 = vsel %vm528, %v513, 80
        %v549 = vsel %vm529, %v514, 80
        %v550 = vsel %vm530, %v514, 80
        %v551 = vsel %vm531, %v515, 80
        %v552 = vsel %vm532, %v515, 80
        %v553 = vsel %vm533, %v516, 80
        %v554 = vsel %vm534, %v516, 80
        %v555 = vsel %vm535, %v517, 80
        %v556 = vsel %vm536, %v517, 80
        %v557 = vsel %vm537, %v518, 80
        %v558 = vsel %vm538, %v518, 80
        %vm559 = vcmp.lt.s32.totalorder %v539, %v543
        %v560 = vsel %vm559, %v539, %v543
        %vm561 = vcmp.lt.s32.totalorder %v541, %v545
        %v562 = vsel %vm561, %v541, %v545
        %vm563 = vcmp.lt.s32.totalorder %v560, %v547
        %v564 = vsel %vm563, %v560, %v547
        %vm565 = vcmp.lt.s32.totalorder %v562, %v549
        %v566 = vsel %vm565, %v562, %v549
        %vm567 = vcmp.lt.s32.totalorder %v564, %v551
        %v568 = vsel %vm567, %v564, %v551
        %vm569 = vcmp.lt.s32.totalorder %v566, %v553
        %v570 = vsel %vm569, %v566, %v553
        %vm571 = vcmp.lt.s32.totalorder %v568, %v555
        %v572 = vsel %vm571, %v568, %v555
        %vm573 = vcmp.lt.s32.totalorder %v570, %v557
        %v574 = vsel %vm573, %v570, %v557
        %vm575 = vcmp.lt.s32.totalorder %v572, %v574
        %v576 = vsel %vm575, %v572, %v574
        %v577 = vrot.slane %v576, 4
        %vm578 = vcmp.lt.s32.totalorder %v576, %v577
        %v579 = vsel %vm578, %v576, %v577
        %v580 = vrot.slane %v579, 2
        %vm581 = vcmp.lt.s32.totalorder %v579, %v580
        %v582 = vsel %vm581, %v579, %v580
        %v583 = vrot.slane %v582, 1
        %vm584 = vcmp.lt.s32.totalorder %v582, %v583
        %v585 = vsel %vm584, %v582, %v583
        %vm586 = vcmp.lt.s32.totalorder %v540, %v544
        %v587 = vsel %vm586, %v540, %v544
        %vm588 = vcmp.lt.s32.totalorder %v542, %v546
        %v589 = vsel %vm588, %v542, %v546
        %vm590 = vcmp.lt.s32.totalorder %v587, %v548
        %v591 = vsel %vm590, %v587, %v548
        %vm592 = vcmp.lt.s32.totalorder %v589, %v550
        %v593 = vsel %vm592, %v589, %v550
        %vm594 = vcmp.lt.s32.totalorder %v591, %v552
        %v595 = vsel %vm594, %v591, %v552
        %vm596 = vcmp.lt.s32.totalorder %v593, %v554
        %v597 = vsel %vm596, %v593, %v554
        %vm598 = vcmp.lt.s32.totalorder %v595, %v556
        %v599 = vsel %vm598, %v595, %v556
        %vm600 = vcmp.lt.s32.totalorder %v597, %v558
        %v601 = vsel %vm600, %v597, %v558
        %vm602 = vcmp.lt.s32.totalorder %v599, %v601
        %v603 = vsel %vm602, %v599, %v601
        %v604 = vrot.slane %v603, 4
        %vm605 = vcmp.lt.s32.totalorder %v603, %v604
        %v606 = vsel %vm605, %v603, %v604
        %v607 = vrot.slane %v606, 2
        %vm608 = vcmp.lt.s32.totalorder %v606, %v607
        %v609 = vsel %vm608, %v606, %v607
        %v610 = vrot.slane %v609, 1
        %vm611 = vcmp.lt.s32.totalorder %v609, %v610
        %v612 = vsel %vm611, %v609, %v610
        %v613 = vcvt.s32.f32 %v585
        %v614 = vcvt.s32.f32 %v612
        %v615 = vmul.f32 %v613, 640.0
        %v616 = vmul.f32 %v614, 640.0
        %v617 = vadd.f32 %v446, %v615
        %v618 = vadd.f32 %v448, %v616
        %v619 = vsel %vm314, %v617, %v492
        %v620 = vsel %vm314, %v618, %v507
        %vm621 = vcmask 1044480
        %v622 = vsel %vm621, %v619, %v613
        %v623 = vsel %vm621, %v620, %v614
        %vm624 = vcmask 1045504
        %v625 = vsel %vm624, %v622, 0.0
        %v626 = vsel %vm624, %v623, 0.0
        %627 = vst [vmem:[%s188] sm:$0xff] %v625
        %628 = vst [vmem:[%s188 + $0x8] sm:$0xff] %v626
        %s629 = sand.u32 %s109, 1
        %s630 = scalar_lea.sflag [#allocation3], %s629
        %s631 = sand.u32 %s109, 1
        %s632 = smul.addr %s631, 16
        %s633 = scalar_lea.vmem [#allocation2], %s632
        // Predicated region
        $region33: #{tpu_custom_call.1} parent=31 // pred_check
          %p634 = pneg %p119
        $region34: #{tpu_custom_call.1} parent=31 // pred_check_branch
          %636 = sbr.rel (%p634) target = $region36
        $region35: #{tpu_custom_call.1} parent=31 // pred_region
          %s637 = smul.u32 2, %s22
          %s639 = ssub.s32 256, 256
          %640 = vsyncadd %s630, %s639
          %s641 = smul.addr %s21, 2
          %s642 = sadd.s32 %s637, %s641
          %s643 = smul.addr %s642, 128
          %s644 = scalar_lea.hbm %s3, %s643
          %s646 = sshll.u32 %s633, 4
          %s647 = int_to_ptr.vmem [resolvable:$true] %s646
          %649 = dma.vmem_to_hbm [thread:$0]  %s647, 256, %s644, %s630
        $region36: #{tpu_custom_call.1} parent=31 // pred_fallthru
          _
      $region32: #{tpu_custom_call.1} parent=5 // pred_fallthru
        _
      %p650 = scmp.le.s32.totalorder 2, %s12
      // Predicated region
      $region37: #{tpu_custom_call.1} parent=5 // pred_check
        %p651 = pneg %p650
      $region38: #{tpu_custom_call.1} parent=5 // pred_check_branch
        %653 = sbr.rel (%p651) target = $region40
      $region39: #{tpu_custom_call.1} parent=5 // pred_region
        %s654 = ssub.s32 %s12, 2
        // Predicated region
        $region41: #{tpu_custom_call.1} parent=39 // pred_check
          %p655 = pneg %p125
        $region42: #{tpu_custom_call.1} parent=39 // pred_check_branch
          %657 = sbr.rel (%p655) target = $region44
        $region43: #{tpu_custom_call.1} parent=39 // pred_region
          %s658 = sand.u32 %s110, 1
          %s659 = scalar_lea.sflag [#allocation3], %s658
          %s660 = sand.u32 %s110, 1
          %s661 = smul.addr %s660, 16
          %s662 = scalar_lea.vmem [#allocation2], %s661
          %663 = dma.done %s659, 256
        $region44: #{tpu_custom_call.1} parent=39 // pred_fallthru
          _
      $region40: #{tpu_custom_call.1} parent=5 // pred_fallthru
        _
    $region6: #{tpu_custom_call.1} parent=1 // loop_footer
      %s16 = sadd.s32 1, %s12
    $region7: #{tpu_custom_call.1} parent=1 // loop_footer_branch
      %11 = sbr.rel target = $region3
    $region8: #{tpu_custom_call.1} parent=1 // loop_exit
      _
    %664 = vsyncpa [#allocation3], 1
    %s665 = scalar_lea.sflag [#allocation3], 1
    %666 = vsyncpa %s665, 1

</llo_original>
